<compile_context>
chip_gen: v7x
topology: tpu7x:2x2x1
jax: 0.10.0
libtpu: 0.0.40
codegen_flags: <defaults>
</compile_context>

<pallas_src>
import functools

import jax
import jax.numpy as jnp
from jax import lax
from jax.experimental import pallas as pl
from jax.experimental.pallas import tpu as pltpu

L_TAU = 0.8
INITIAL_BIAS = -0.5


def _round_up(v, m):
    return (v + m - 1) // m * m


def _snu_chunk_kernel(*refs, l_tau, tt, t_actual, t_pad, with_init):
    """One grid step = TT timesteps for one batch block.

    refs (with_init=False):
      b_ref:     (1,)              f32  SMEM  scalar spike-threshold bias
      x_ref:     (tt, tb, Cin_p)        VMEM  input chunk
      w_ref:     (Cin_p, Cout_p)        VMEM  transposed Linear weight (resident)
      y_seq_ref: (tt, tb, Cout_p)       VMEM  spike output chunk (bf16 or f32)
      s_ref:     (tb, Cout_p)      f32  VMEM  membrane state  (resident over time)
      y_ref:     (tb, Cout_p)      f32  VMEM  previous spikes (resident over time)
    with_init=True additionally has s0_ref / y0_ref (tb, Cout_p) after w_ref.
    """
    if with_init:
        (b_ref, x_ref, w_ref, s0_ref, y0_ref, y_seq_ref, s_ref, y_ref) = refs
    else:
        (b_ref, x_ref, w_ref, y_seq_ref, s_ref, y_ref) = refs

    tc = pl.program_id(1)

    # Load / zero the carried state into the resident output blocks at the
    # start of each batch block's time loop.
    @pl.when(tc == 0)
    def _():
        if with_init:
            s_ref[...] = s0_ref[...]
            y_ref[...] = y0_ref[...]
        else:
            s_ref[...] = jnp.zeros_like(s_ref)
            y_ref[...] = jnp.zeros_like(y_ref)

    _, tb, cin_p = x_ref.shape
    cout_p = s_ref.shape[-1]

    # Hoisted MXU matmul for the whole chunk: pre-activations do not depend on
    # the recurrent state, so do one (tt*tb, cin_p) @ (cin_p, cout_p) call
    # (MXU sees M = tt*tb rows instead of tb tiny calls), f32 accumulate.
    x2d = x_ref[...].reshape(tt * tb, cin_p)
    pre = jnp.dot(x2d, w_ref[...], preferred_element_type=jnp.float32)
    pre = pre.reshape(tt, tb, cout_p)

    # Scalar bias read from SMEM once per chunk.
    neg_thr = -b_ref[0]

    need_mask = t_pad != t_actual  # static

    s_prev = s_ref[...]
    y_prev = y_ref[...]
    # Fully-unrolled per-timestep recurrence (tt is small and static — this is
    # the full unroll; Python indices keep all slice/store offsets constant for
    # Mosaic). Only the cheap elementwise update runs per step.
    for i in range(tt):
        # Leaky state update gated by previous spikes, then ELU (alpha=1).
        u = pre[i] + l_tau * s_prev * (1.0 - y_prev)
        s_new = jnp.where(u > 0.0, u, jnp.exp(jnp.minimum(u, 0.0)) - 1.0)
        # Spike: heaviside(s + b)  <=>  s > -b  (strict '>', measure-zero diff,
        # kept from the previously validated implementation).
        spikes = (s_new > neg_thr).astype(jnp.float32)
        y_seq_ref[i] = spikes.astype(y_seq_ref.dtype)
        if need_mask:
            # Padded tail timesteps must not advance the recurrent state.
            valid = (tc * tt + i) < t_actual
            s_new = jnp.where(valid, s_new, s_prev)
            spikes = jnp.where(valid, spikes, y_prev)
        s_prev, y_prev = s_new, spikes

    # Carry state in VMEM (only the last chunk's value reaches HBM).
    s_ref[...] = s_prev
    y_ref[...] = y_prev


@functools.partial(
    jax.jit,
    static_argnames=("l_tau", "tb", "tt", "matmul_dtype", "spike_dtype"))
def snu_forward_seq(x_seq, w_t, b, s0=None, y0=None, *, l_tau=L_TAU,
                    tb=None, tt=None,
                    matmul_dtype=jnp.float32, spike_dtype=jnp.bfloat16):
    """Run T SNU timesteps in a single fused, time-chunked Pallas kernel.

    x_seq: (T, B, Cin)   float32
    w_t:   (Cin, Cout)   float32  (transposed PyTorch Linear weight)
    b:     (1,)          float32  scalar bias
    s0,y0: (B, Cout)     float32  optional initial state (zeros if None)

    Returns (y_seq, s_final, y_final). y_seq has dtype `spike_dtype`
    (bfloat16 by default — spikes are exactly 0/1, so the cast is lossless).
    Pass matmul_dtype=jnp.bfloat16 for large problems to halve the x/W HBM
    stream (spikes near the threshold may then differ from an f32 reference).
    """
    T, B, Cin = x_seq.shape
    Cout = w_t.shape[1]

    matmul_dtype = jnp.dtype(matmul_dtype)
    spike_dtype = jnp.dtype(spike_dtype)

    # Lane/sublane-dense padding: features -> multiples of 128; batch -> the
    # batch tile (multiple of 8, or 16 when the spike output is bf16 so its
    # blocks stay tile-aligned). Zero padding is neutral and sliced off.
    sub = 8 if spike_dtype.itemsize >= 4 else 16
    cin_p = _round_up(Cin, 128)
    cout_p = _round_up(Cout, 128)

    if tb is None:
        if B < 16:
            tb = _round_up(B, sub)                       # single batch block
        else:
            # >= 2 batch blocks so the 'parallel' axis can use both v7x cores.
            tb = min(_round_up((B + 1) // 2, sub), 256)
    else:
        tb = _round_up(tb, sub)
    b_p = _round_up(B, tb)

    # Time chunk: TT timesteps per grid step.
    if tt is None:
        tt = min(T, 16)
        # Keep the double-buffered x / y_seq chunk streams modest.
        bytes_per_step = 2 * tb * (cin_p * matmul_dtype.itemsize
                                   + cout_p * spike_dtype.itemsize)
        while tt > 1 and tt * bytes_per_step > (16 << 20):
            tt //= 2
    tt = max(1, min(tt, T))
    t_pad = _round_up(T, tt)

    x_p = jnp.pad(x_seq, ((0, t_pad - T), (0, b_p - B), (0, cin_p - Cin)))
    x_p = x_p.astype(matmul_dtype)
    w_p = jnp.pad(w_t, ((0, cin_p - Cin), (0, cout_p - Cout))).astype(matmul_dtype)
    b_arr = jnp.asarray(b, jnp.float32).reshape((1,))

    with_init = (s0 is not None) or (y0 is not None)
    args = [b_arr, x_p, w_p]
    in_specs = [
        pl.BlockSpec(memory_space=pltpu.MemorySpace.SMEM),             # bias
        pl.BlockSpec((tt, tb, cin_p), lambda bb, tc: (tc, bb, 0)),     # x chunk
        pl.BlockSpec((cin_p, cout_p), lambda bb, tc: (0, 0)),          # W (resident)
    ]
    if with_init:
        s0 = jnp.zeros((B, Cout), jnp.float32) if s0 is None else s0
        y0 = jnp.zeros((B, Cout), jnp.float32) if y0 is None else y0
        s0_p = jnp.pad(s0.astype(jnp.float32), ((0, b_p - B), (0, cout_p - Cout)))
        y0_p = jnp.pad(y0.astype(jnp.float32), ((0, b_p - B), (0, cout_p - Cout)))
        args += [s0_p, y0_p]
        in_specs += [pl.BlockSpec((tb, cout_p), lambda bb, tc: (bb, 0)),
                     pl.BlockSpec((tb, cout_p), lambda bb, tc: (bb, 0))]

    grid = (b_p // tb, t_pad // tt)   # (batch blocks: parallel, time: serial)

    out_shape = (
        jax.ShapeDtypeStruct((t_pad, b_p, cout_p), spike_dtype),   # spike train
        jax.ShapeDtypeStruct((b_p, cout_p), jnp.float32),          # final s
        jax.ShapeDtypeStruct((b_p, cout_p), jnp.float32),          # final y
    )
    out_specs = (
        pl.BlockSpec((tt, tb, cout_p), lambda bb, tc: (tc, bb, 0)),
        pl.BlockSpec((tb, cout_p), lambda bb, tc: (bb, 0)),        # resident over t
        pl.BlockSpec((tb, cout_p), lambda bb, tc: (bb, 0)),        # resident over t
    )

    # Raise the scoped VMEM limit only when the chunk plan needs it (v5e's
    # default is 16 MiB); cap at 64 MiB so the same value is valid on v7x.
    vmem_est = (2 * tt * tb * cin_p * matmul_dtype.itemsize          # x (dbl buf)
                + 2 * tt * tb * cout_p * spike_dtype.itemsize        # y_seq (dbl buf)
                + 2 * cin_p * cout_p * matmul_dtype.itemsize         # weight
                + (4 + (4 if with_init else 0)) * tb * cout_p * 4    # state blocks
                + tt * tb * cout_p * 4)                              # pre-activations
    vmem_limit = None
    if vmem_est > (24 << 20):
        vmem_limit = min(int(vmem_est * 5 // 4) + (4 << 20), 64 << 20)

    kernel = functools.partial(_snu_chunk_kernel, l_tau=l_tau, tt=tt,
                               t_actual=T, t_pad=t_pad, with_init=with_init)

    y_seq_p, s_fin_p, y_fin_p = pl.pallas_call(
        kernel,
        out_shape=out_shape,
        grid=grid,
        in_specs=in_specs,
        out_specs=out_specs,
        compiler_params=pltpu.CompilerParams(
            dimension_semantics=("parallel", "arbitrary"),
            vmem_limit_bytes=vmem_limit,
        ),
    )(*args)

    return (
        y_seq_p[:T, :B, :Cout],
        s_fin_p[:B, :Cout],
        y_fin_p[:B, :Cout],
    )


if __name__ == "__main__":
    key = jax.random.PRNGKey(0)
    kx, kw, ks, ky = jax.random.split(key, 4)

    T, B, Cin, Cout = 8, 8, 32, 32

    # Deterministic synthetic parameters. PyTorch Linear weight is (Cout, Cin);
    # the kernel takes it pre-transposed as (Cin, Cout).
    w = jax.random.uniform(kw, (Cout, Cin), jnp.float32, minval=-0.2, maxval=0.2)
    w_t = w.T
    b = jnp.array([INITIAL_BIAS], dtype=jnp.float32)
    x_seq = jax.random.normal(kx, (T, B, Cin), jnp.float32)

    def reference(x_seq, s0, y0):
        def ref_step(carry, x):
            s_prev, y_prev = carry
            pre = jnp.dot(x, w_t, precision=lax.Precision.HIGHEST)
            u = pre + L_TAU * s_prev * (1.0 - y_prev)
            s = jnp.where(u > 0.0, u, jnp.exp(jnp.minimum(u, 0.0)) - 1.0)
            y = (s + b[0] > 0.0).astype(jnp.float32)
            return (s, y), y
        (rs, ry), ry_seq = lax.scan(ref_step, (s0, y0), x_seq)
        return ry_seq, rs, ry

    zeros = jnp.zeros((B, Cout), jnp.float32)

    # --- Test 1: zero initial state (module's initialize_state path) with a
    # small time chunk (tt=3) so multi-chunk carry + padded-tail masking runs.
    y_seq, s_fin, y_fin = snu_forward_seq(x_seq, w_t, b, tt=3)
    jax.block_until_ready((y_seq, s_fin, y_fin))
    ry_seq, rs_fin, ry_fin = reference(x_seq, zeros, zeros)
    assert jnp.allclose(s_fin, rs_fin, atol=1e-4, rtol=1e-4), "t1: final state mismatch"
    assert jnp.allclose(y_seq.astype(jnp.float32), ry_seq), "t1: spike train mismatch"
    assert jnp.allclose(y_fin, ry_fin), "t1: final spike mismatch"

    # --- Test 2: caller-provided initial state, default chunking.
    s0 = 0.3 * jax.random.normal(ks, (B, Cout), jnp.float32)
    y0 = (jax.random.uniform(ky, (B, Cout)) > 0.5).astype(jnp.float32)
    y_seq2, s_fin2, y_fin2 = snu_forward_seq(x_seq, w_t, b, s0, y0)
    jax.block_until_ready((y_seq2, s_fin2, y_fin2))
    ry_seq2, rs_fin2, ry_fin2 = reference(x_seq, s0, y0)
    assert jnp.allclose(s_fin2, rs_fin2, atol=1e-4, rtol=1e-4), "t2: final state mismatch"
    assert jnp.allclose(y_seq2.astype(jnp.float32), ry_seq2), "t2: spike train mismatch"
    assert jnp.allclose(y_fin2, ry_fin2), "t2: final spike mismatch"

    print("KERNEL_OK")
</pallas_src>

<mosaic_0001>
module attributes {stable_mosaic.version = 11 : i64} {
  func.func @_snu_chunk_kernel(%arg0: i32, %arg1: i32, %arg2: memref<1xf32, #tpu.memory_space<smem>>, %arg3: memref<3x16x128xf32, #tpu.memory_space<vmem>>, %arg4: memref<128x128xf32, #tpu.memory_space<vmem>>, %arg5: memref<3x16x128xbf16, #tpu.memory_space<vmem>>, %arg6: memref<16x128xf32, #tpu.memory_space<vmem>>, %arg7: memref<16x128xf32, #tpu.memory_space<vmem>>) attributes {dimension_semantics = [#tpu.dimension_semantics<parallel>, #tpu.dimension_semantics<arbitrary>], iteration_bounds = array<i64: 1, 3>, scalar_prefetch = 0 : i64, scratch_operands = 0 : i64, tpu.core_type = #tpu.core_type<tc>, window_params = [{transform_indices = @transform_0, window_bounds = array<i64: 1>}, {transform_indices = @transform_1, window_bounds = array<i64: 3, 16, 128>}, {pipeline_mode = #tpu.pipeline_mode<synchronous>, transform_indices = @transform_2, window_bounds = array<i64: 128, 128>}, {transform_indices = @transform_3, window_bounds = array<i64: 3, 16, 128>}, {transform_indices = @transform_4, window_bounds = array<i64: 16, 128>}, {transform_indices = @transform_5, window_bounds = array<i64: 16, 128>}]} {
    %c0_i32 = arith.constant 0 : i32
    %0 = arith.cmpi eq, %arg1, %c0_i32 : i32
    %1 = arith.extui %0 : i1 to i32
    %c0_i32_0 = arith.constant 0 : i32
    %2 = arith.cmpi ne, %1, %c0_i32_0 : i32
    scf.if %2 {
      %cst_42 = arith.constant 0.000000e+00 : f32
      %101 = vector.broadcast %cst_42 : f32 to vector<16x128xf32>
      %c0_43 = arith.constant 0 : index
      %c0_44 = arith.constant 0 : index
      %102 = vector.load %arg6[%c0_43, %c0_44] : memref<16x128xf32, #tpu.memory_space<vmem>>, vector<16x128xf32>
      tpu.vector_store %arg6[%c0_43, %c0_44], %101 {strides = array<i32>} : memref<16x128xf32, #tpu.memory_space<vmem>>, vector<16x128xf32>,
      %cst_45 = arith.constant 0.000000e+00 : f32
      %103 = vector.broadcast %cst_45 : f32 to vector<16x128xf32>
      %c0_46 = arith.constant 0 : index
      %c0_47 = arith.constant 0 : index
      %104 = vector.load %arg7[%c0_46, %c0_47] : memref<16x128xf32, #tpu.memory_space<vmem>>, vector<16x128xf32>
      tpu.vector_store %arg7[%c0_46, %c0_47], %103 {strides = array<i32>} : memref<16x128xf32, #tpu.memory_space<vmem>>, vector<16x128xf32>,
    } else {
    }
    %c0 = arith.constant 0 : index
    %c0_1 = arith.constant 0 : index
    %c0_2 = arith.constant 0 : index
    %3 = vector.load %arg3[%c0, %c0_1, %c0_2] : memref<3x16x128xf32, #tpu.memory_space<vmem>>, vector<3x16x128xf32>
    %4 = vector.shape_cast %3 : vector<3x16x128xf32> to vector<48x128xf32>
    %c0_3 = arith.constant 0 : index
    %c0_4 = arith.constant 0 : index
    %5 = vector.load %arg4[%c0_3, %c0_4] : memref<128x128xf32, #tpu.memory_space<vmem>>, vector<128x128xf32>
    %cst = arith.constant dense<0.000000e+00> : vector<48x128xf32>
    %6 = tpu.matmul %4, %5, %cst {dimension_numbers = #tpu.dot_dimension_numbers<[1], [0], [0], [1], [0, 0, 1, 1], [], []>} : vector<48x128xf32>, vector<128x128xf32>, vector<48x128xf32> -> vector<48x128xf32>
    %7 = vector.shape_cast %6 : vector<48x128xf32> to vector<3x16x128xf32>
    %c0_5 = arith.constant 0 : index
    %8 = memref.load %arg2[%c0_5] : memref<1xf32, #tpu.memory_space<smem>>
    %cst_6 = arith.constant 0.000000e+00 : f32
    %9 = arith.subf %cst_6, %8 : f32
    %c0_7 = arith.constant 0 : index
    %c0_8 = arith.constant 0 : index
    %10 = vector.load %arg6[%c0_7, %c0_8] : memref<16x128xf32, #tpu.memory_space<vmem>>, vector<16x128xf32>
    %c0_9 = arith.constant 0 : index
    %c0_10 = arith.constant 0 : index
    %11 = vector.load %arg7[%c0_9, %c0_10] : memref<16x128xf32, #tpu.memory_space<vmem>>, vector<16x128xf32>
    %12 = vector.extract_strided_slice %7 {offsets = [0, 0, 0], sizes = [1, 16, 128], strides = [1, 1, 1]} : vector<3x16x128xf32> to vector<1x16x128xf32>
    %13 = vector.shape_cast %12 : vector<1x16x128xf32> to vector<16x128xf32>
    %cst_11 = arith.constant 8.000000e-01 : f32
    %14 = vector.broadcast %cst_11 : f32 to vector<16x128xf32>
    %15 = arith.mulf %14, %10 : vector<16x128xf32>
    %cst_12 = arith.constant 1.000000e+00 : f32
    %16 = vector.broadcast %cst_12 : f32 to vector<16x128xf32>
    %17 = arith.subf %16, %11 : vector<16x128xf32>
    %18 = arith.mulf %15, %17 : vector<16x128xf32>
    %19 = arith.addf %13, %18 : vector<16x128xf32>
    %cst_13 = arith.constant 0.000000e+00 : f32
    %20 = vector.broadcast %cst_13 : f32 to vector<16x128xf32>
    %21 = arith.cmpf ogt, %19, %20 : vector<16x128xf32>
    %cst_14 = arith.constant 0.000000e+00 : f32
    %22 = vector.broadcast %cst_14 : f32 to vector<16x128xf32>
    %23 = arith.minimumf %19, %22 : vector<16x128xf32>
    %24 = math.exp %23 : vector<16x128xf32>
    %cst_15 = arith.constant 1.000000e+00 : f32
    %25 = vector.broadcast %cst_15 : f32 to vector<16x128xf32>
    %26 = arith.subf %24, %25 : vector<16x128xf32>
    %27 = arith.select %21, %19, %26 : vector<16x128xi1>, vector<16x128xf32>
    %28 = vector.broadcast %9 : f32 to vector<16x128xf32>
    %29 = arith.cmpf ogt, %27, %28 : vector<16x128xf32>
    %30 = arith.extui %29 : vector<16x128xi1> to vector<16x128xi32>
    %31 = arith.sitofp %30 : vector<16x128xi32> to vector<16x128xf32>
    %32 = arith.truncf %31 : vector<16x128xf32> to vector<16x128xbf16>
    %c0_16 = arith.constant 0 : index
    %c0_17 = arith.constant 0 : index
    %c0_18 = arith.constant 0 : index
    %33 = vector.load %arg5[%c0_16, %c0_17, %c0_18] : memref<3x16x128xbf16, #tpu.memory_space<vmem>>, vector<1x16x128xbf16>
    %34 = vector.shape_cast %33 : vector<1x16x128xbf16> to vector<16x128xbf16>
    %35 = vector.shape_cast %32 : vector<16x128xbf16> to vector<1x16x128xbf16>
    tpu.vector_store %arg5[%c0_16, %c0_17, %c0_18], %35 {strides = array<i32>} : memref<3x16x128xbf16, #tpu.memory_space<vmem>>, vector<1x16x128xbf16>,
    %c3_i32 = arith.constant 3 : i32
    %36 = arith.muli %arg1, %c3_i32 : i32
    %c0_i32_19 = arith.constant 0 : i32
    %37 = arith.addi %36, %c0_i32_19 : i32
    %c8_i32 = arith.constant 8 : i32
    %38 = arith.cmpi slt, %37, %c8_i32 : i32
    %39 = arith.select %38, %27, %10 : vector<16x128xf32>
    %40 = arith.select %38, %31, %11 : vector<16x128xf32>
    %41 = vector.extract_strided_slice %7 {offsets = [1, 0, 0], sizes = [1, 16, 128], strides = [1, 1, 1]} : vector<3x16x128xf32> to vector<1x16x128xf32>
    %42 = vector.shape_cast %41 : vector<1x16x128xf32> to vector<16x128xf32>
    %cst_20 = arith.constant 8.000000e-01 : f32
    %43 = vector.broadcast %cst_20 : f32 to vector<16x128xf32>
    %44 = arith.mulf %43, %39 : vector<16x128xf32>
    %cst_21 = arith.constant 1.000000e+00 : f32
    %45 = vector.broadcast %cst_21 : f32 to vector<16x128xf32>
    %46 = arith.subf %45, %40 : vector<16x128xf32>
    %47 = arith.mulf %44, %46 : vector<16x128xf32>
    %48 = arith.addf %42, %47 : vector<16x128xf32>
    %cst_22 = arith.constant 0.000000e+00 : f32
    %49 = vector.broadcast %cst_22 : f32 to vector<16x128xf32>
    %50 = arith.cmpf ogt, %48, %49 : vector<16x128xf32>
    %cst_23 = arith.constant 0.000000e+00 : f32
    %51 = vector.broadcast %cst_23 : f32 to vector<16x128xf32>
    %52 = arith.minimumf %48, %51 : vector<16x128xf32>
    %53 = math.exp %52 : vector<16x128xf32>
    %cst_24 = arith.constant 1.000000e+00 : f32
    %54 = vector.broadcast %cst_24 : f32 to vector<16x128xf32>
    %55 = arith.subf %53, %54 : vector<16x128xf32>
    %56 = arith.select %50, %48, %55 : vector<16x128xi1>, vector<16x128xf32>
    %57 = vector.broadcast %9 : f32 to vector<16x128xf32>
    %58 = arith.cmpf ogt, %56, %57 : vector<16x128xf32>
    %59 = arith.extui %58 : vector<16x128xi1> to vector<16x128xi32>
    %60 = arith.sitofp %59 : vector<16x128xi32> to vector<16x128xf32>
    %61 = arith.truncf %60 : vector<16x128xf32> to vector<16x128xbf16>
    %c1 = arith.constant 1 : index
    %c0_25 = arith.constant 0 : index
    %c0_26 = arith.constant 0 : index
    %62 = vector.load %arg5[%c1, %c0_25, %c0_26] : memref<3x16x128xbf16, #tpu.memory_space<vmem>>, vector<1x16x128xbf16>
    %63 = vector.shape_cast %62 : vector<1x16x128xbf16> to vector<16x128xbf16>
    %64 = vector.shape_cast %61 : vector<16x128xbf16> to vector<1x16x128xbf16>
    tpu.vector_store %arg5[%c1, %c0_25, %c0_26], %64 {strides = array<i32>} : memref<3x16x128xbf16, #tpu.memory_space<vmem>>, vector<1x16x128xbf16>,
    %c3_i32_27 = arith.constant 3 : i32
    %65 = arith.muli %arg1, %c3_i32_27 : i32
    %c1_i32 = arith.constant 1 : i32
    %66 = arith.addi %65, %c1_i32 : i32
    %c8_i32_28 = arith.constant 8 : i32
    %67 = arith.cmpi slt, %66, %c8_i32_28 : i32
    %68 = arith.select %67, %56, %39 : vector<16x128xf32>
    %69 = arith.select %67, %60, %40 : vector<16x128xf32>
    %70 = vector.extract_strided_slice %7 {offsets = [2, 0, 0], sizes = [1, 16, 128], strides = [1, 1, 1]} : vector<3x16x128xf32> to vector<1x16x128xf32>
    %71 = vector.shape_cast %70 : vector<1x16x128xf32> to vector<16x128xf32>
    %cst_29 = arith.constant 8.000000e-01 : f32
    %72 = vector.broadcast %cst_29 : f32 to vector<16x128xf32>
    %73 = arith.mulf %72, %68 : vector<16x128xf32>
    %cst_30 = arith.constant 1.000000e+00 : f32
    %74 = vector.broadcast %cst_30 : f32 to vector<16x128xf32>
    %75 = arith.subf %74, %69 : vector<16x128xf32>
    %76 = arith.mulf %73, %75 : vector<16x128xf32>
    %77 = arith.addf %71, %76 : vector<16x128xf32>
    %cst_31 = arith.constant 0.000000e+00 : f32
    %78 = vector.broadcast %cst_31 : f32 to vector<16x128xf32>
    %79 = arith.cmpf ogt, %77, %78 : vector<16x128xf32>
    %cst_32 = arith.constant 0.000000e+00 : f32
    %80 = vector.broadcast %cst_32 : f32 to vector<16x128xf32>
    %81 = arith.minimumf %77, %80 : vector<16x128xf32>
    %82 = math.exp %81 : vector<16x128xf32>
    %cst_33 = arith.constant 1.000000e+00 : f32
    %83 = vector.broadcast %cst_33 : f32 to vector<16x128xf32>
    %84 = arith.subf %82, %83 : vector<16x128xf32>
    %85 = arith.select %79, %77, %84 : vector<16x128xi1>, vector<16x128xf32>
    %86 = vector.broadcast %9 : f32 to vector<16x128xf32>
    %87 = arith.cmpf ogt, %85, %86 : vector<16x128xf32>
    %88 = arith.extui %87 : vector<16x128xi1> to vector<16x128xi32>
    %89 = arith.sitofp %88 : vector<16x128xi32> to vector<16x128xf32>
    %90 = arith.truncf %89 : vector<16x128xf32> to vector<16x128xbf16>
    %c2 = arith.constant 2 : index
    %c0_34 = arith.constant 0 : index
    %c0_35 = arith.constant 0 : index
    %91 = vector.load %arg5[%c2, %c0_34, %c0_35] : memref<3x16x128xbf16, #tpu.memory_space<vmem>>, vector<1x16x128xbf16>
    %92 = vector.shape_cast %91 : vector<1x16x128xbf16> to vector<16x128xbf16>
    %93 = vector.shape_cast %90 : vector<16x128xbf16> to vector<1x16x128xbf16>
    tpu.vector_store %arg5[%c2, %c0_34, %c0_35], %93 {strides = array<i32>} : memref<3x16x128xbf16, #tpu.memory_space<vmem>>, vector<1x16x128xbf16>,
    %c3_i32_36 = arith.constant 3 : i32
    %94 = arith.muli %arg1, %c3_i32_36 : i32
    %c2_i32 = arith.constant 2 : i32
    %95 = arith.addi %94, %c2_i32 : i32
    %c8_i32_37 = arith.constant 8 : i32
    %96 = arith.cmpi slt, %95, %c8_i32_37 : i32
    %97 = arith.select %96, %85, %68 : vector<16x128xf32>
    %98 = arith.select %96, %89, %69 : vector<16x128xf32>
    %c0_38 = arith.constant 0 : index
    %c0_39 = arith.constant 0 : index
    %99 = vector.load %arg6[%c0_38, %c0_39] : memref<16x128xf32, #tpu.memory_space<vmem>>, vector<16x128xf32>
    tpu.vector_store %arg6[%c0_38, %c0_39], %97 {strides = array<i32>} : memref<16x128xf32, #tpu.memory_space<vmem>>, vector<16x128xf32>,
    %c0_40 = arith.constant 0 : index
    %c0_41 = arith.constant 0 : index
    %100 = vector.load %arg7[%c0_40, %c0_41] : memref<16x128xf32, #tpu.memory_space<vmem>>, vector<16x128xf32>
    tpu.vector_store %arg7[%c0_40, %c0_41], %98 {strides = array<i32>} : memref<16x128xf32, #tpu.memory_space<vmem>>, vector<16x128xf32>,
    return
  }
  func.func @transform_0(%arg0: i32, %arg1: i32) -> i32 {
    %c0_i32 = arith.constant 0 : i32
    %c0_i32_0 = arith.constant 0 : i32
    return %c0_i32 : i32
  }
  func.func @transform_1(%arg0: i32, %arg1: i32) -> (i32, i32, i32) {
    %c0_i32 = arith.constant 0 : i32
    %c0_i32_0 = arith.constant 0 : i32
    return %arg1, %arg0, %c0_i32 : i32, i32, i32
  }
  func.func @transform_2(%arg0: i32, %arg1: i32) -> (i32, i32) {
    %c0_i32 = arith.constant 0 : i32
    %c0_i32_0 = arith.constant 0 : i32
    %c0_i32_1 = arith.constant 0 : i32
    return %c0_i32, %c0_i32_0 : i32, i32
  }
  func.func @transform_3(%arg0: i32, %arg1: i32) -> (i32, i32, i32) {
    %c0_i32 = arith.constant 0 : i32
    %c0_i32_0 = arith.constant 0 : i32
    return %arg1, %arg0, %c0_i32 : i32, i32, i32
  }
  func.func @transform_4(%arg0: i32, %arg1: i32) -> (i32, i32) {
    %c0_i32 = arith.constant 0 : i32
    %c0_i32_0 = arith.constant 0 : i32
    return %arg0, %c0_i32 : i32, i32
  }
  func.func @transform_5(%arg0: i32, %arg1: i32) -> (i32, i32) {
    %c0_i32 = arith.constant 0 : i32
    %c0_i32_0 = arith.constant 0 : i32
    return %arg0, %c0_i32 : i32, i32
  }
}

</mosaic_0001>

<llo_original>
// kernel: snu_forward_seq.1
$region0: #{snu_forward_seq.1}
  #allocation0 [shape = 'u32[]', space=smem, size = 0x4, offset = 0x4, fixed_abs, tag = 'smem constant byte address 0x4 - core index']
  #allocation1 [shape = 'u32[144,128]{1,0:T(1,128)}', space=vmem, size = 0x12000, scoped, tag = 'internal scratch']
  #allocation2 [shape = 'f32[1]{0:T(128)S(6)}', space=smem, size = 0x200, scoped, tag = 'scoped memory for snu_forward_seq.1']
  %s0 = inlined_call_operand.<no memory space> [shape: f32[1], index: 0, kind: input, shape index: {}]
  %s1 = inlined_call_operand.vmem [shape: f32[9,16,128], index: 1, kind: input, shape index: {}]
  %s2 = inlined_call_operand.vmem [shape: f32[128,128], index: 2, kind: input, shape index: {}]
  %s3 = inlined_call_operand.vmem [shape: bf16[9,16,128], index: 3, kind: output, shape index: {0}]
  %s4 = inlined_call_operand.vmem [shape: f32[16,128], index: 4, kind: output, shape index: {1}]
  %s5 = inlined_call_operand.vmem [shape: f32[16,128], index: 5, kind: output, shape index: {2}]
  %6 = xla_tuple %s3, %s4, %s5
  %s7 = sld [smem:[#allocation0]]
  $region65: #{snu_forward_seq.1} parent=0
    _
  %s9 = ssub.s32 1, %s7
  %s10 = scalar_select 0, %s9, %s7
  %11 = sst [smem:[#allocation2]] %s0
  loop: start=0, step=1, limit=5
  $region2: #{snu_forward_seq.1} parent=0 // loop_pre_header
    _
  $region3: #{snu_forward_seq.1} parent=0 // loop_header
    %s13 = sphi 0, %s17
    %p14 = scmp.ge.s32.totalorder %s13, 5
    %s20 = sphi 0, %s32
    %s21 = sphi 0, %s28
    %s22 = sphi 0, %s20
    %s23 = sphi 0, %s21
    %s24 = sphi 0, %s22
    %s25 = sphi 0, %s23
    %s33 = sphi 0, %s33
    %s35 = sphi 0, %s33
    %s36 = sphi 0, %s35
    %s50 = sphi 0, %s36
    %s58 = sphi 0, %s60
    %s61 = sphi 0, %s58
    %s62 = sphi 0, %s61
    %s78 = sphi 0, %s62
    %s82 = sphi 0, %s82
    %s84 = sphi 0, %s82
    %s85 = sphi 0, %s84
    %s99 = sphi 0, %s85
    %s107 = sphi 0, %s109
    %s110 = sphi 0, %s107
    %s111 = sphi 0, %s110
    %s127 = sphi 0, %s111
    %s133 = sphi 0, %s135
    %s136 = sphi 0, %s133
    %s137 = sphi 0, %s136
    %s153 = sphi 0, %s137
    %s159 = sphi 0, %s161
    %s162 = sphi 0, %s159
    %s163 = sphi 0, %s162
    %s179 = sphi 0, %s163
  $region4: #{snu_forward_seq.1} parent=0 // loop_header_branch
    %16 = sbr.rel (%p14) target = $region8
  $region5: #{snu_forward_seq.1} parent=0 // loop_body
    %s18 = ssub.s32 %s13, 1
    %s19 = ssub.s32 %s13, 2
    %s26 = sadd.s32 1, %s21
    %p27 = scmp.ge.s32.totalorder %s26, 3
    %s28 = scalar_select %p27, 0, %s26
    %s29 = sadd.s32 1, %s20
    %s30 = scalar_select %p27, %s29, %s20
    %p31 = scmp.ge.s32.totalorder %s30, 1
    %s32 = scalar_select %p31, 0, %s30
    %s34 = sadd.s32 %s33, 1
    %p37 = scmp.eq.s32.totalorder %s13, 2
    %p38 = scmp.ne.s32.totalorder %s33, %s35
    %p39 = scmp.eq.s32.totalorder %s13, 0
    %p40 = por %p38, %p39
    %p41 = scmp.ne.s32.totalorder %s33, %s35
    %p42 = scmp.eq.s32.totalorder %s18, 2
    %p43 = por %p41, %p42
    %p44 = scmp.ne.s32.totalorder %s35, %s36
    %p45 = scmp.eq.s32.totalorder %s18, 0
    %p46 = por %p44, %p45
    %p47 = scmp.ne.s32.totalorder %s35, %s36
    %p48 = scmp.eq.s32.totalorder %s19, 2
    %p49 = por %p47, %p48
    %p51 = scmp.ne.s32.totalorder %s36, %s50
    %p52 = scmp.eq.s32.totalorder %s19, 0
    %p53 = por %p51, %p52
    %s54 = ssub.s32 %s21, %s28
    %s55 = ssub.s32 %s20, %s32
    %s56 = sor.u32 %s54, %s55
    %p57 = scmp.eq.s32.totalorder %s56, 0
    %s59 = sadd.s32 %s58, 1
    %s60 = scalar_select %p57, %s58, %s59
    %p63 = pneg %p57
    %p64 = scmp.eq.s32.totalorder %s13, 2
    %p65 = por %p63, %p64
    %p66 = scmp.ne.s32.totalorder %s58, %s61
    %p67 = scmp.eq.s32.totalorder %s13, 0
    %p68 = por %p66, %p67
    %p69 = scmp.ne.s32.totalorder %s58, %s61
    %p70 = scmp.eq.s32.totalorder %s18, 2
    %p71 = por %p69, %p70
    %p72 = scmp.ne.s32.totalorder %s61, %s62
    %p73 = scmp.eq.s32.totalorder %s18, 0
    %p74 = por %p72, %p73
    %p75 = scmp.ne.s32.totalorder %s61, %s62
    %p76 = scmp.eq.s32.totalorder %s19, 2
    %p77 = por %p75, %p76
    %p79 = scmp.ne.s32.totalorder %s62, %s78
    %p80 = scmp.eq.s32.totalorder %s19, 0
    %p81 = por %p79, %p80
    %s83 = sadd.s32 %s82, 1
    %p86 = scmp.eq.s32.totalorder %s13, 2
    %p87 = scmp.ne.s32.totalorder %s82, %s84
    %p88 = scmp.eq.s32.totalorder %s13, 0
    %p89 = por %p87, %p88
    %p90 = scmp.ne.s32.totalorder %s82, %s84
    %p91 = scmp.eq.s32.totalorder %s18, 2
    %p92 = por %p90, %p91
    %p93 = scmp.ne.s32.totalorder %s84, %s85
    %p94 = scmp.eq.s32.totalorder %s18, 0
    %p95 = por %p93, %p94
    %p96 = scmp.ne.s32.totalorder %s84, %s85
    %p97 = scmp.eq.s32.totalorder %s19, 2
    %p98 = por %p96, %p97
    %p100 = scmp.ne.s32.totalorder %s85, %s99
    %p101 = scmp.eq.s32.totalorder %s19, 0
    %p102 = por %p100, %p101
    %s103 = ssub.s32 %s21, %s28
    %s104 = ssub.s32 %s20, %s32
    %s105 = sor.u32 %s103, %s104
    %p106 = scmp.eq.s32.totalorder %s105, 0
    %s108 = sadd.s32 %s107, 1
    %s109 = scalar_select %p106, %s107, %s108
    %p112 = pneg %p106
    %p113 = scmp.eq.s32.totalorder %s13, 2
    %p114 = por %p112, %p113
    %p115 = scmp.ne.s32.totalorder %s107, %s110
    %p116 = scmp.eq.s32.totalorder %s13, 0
    %p117 = por %p115, %p116
    %p118 = scmp.ne.s32.totalorder %s107, %s110
    %p119 = scmp.eq.s32.totalorder %s18, 2
    %p120 = por %p118, %p119
    %p121 = scmp.ne.s32.totalorder %s110, %s111
    %p122 = scmp.eq.s32.totalorder %s18, 0
    %p123 = por %p121, %p122
    %p124 = scmp.ne.s32.totalorder %s110, %s111
    %p125 = scmp.eq.s32.totalorder %s19, 2
    %p126 = por %p124, %p125
    %p128 = scmp.ne.s32.totalorder %s111, %s127
    %p129 = scmp.eq.s32.totalorder %s19, 0
    %p130 = por %p128, %p129
    %s131 = ssub.s32 %s20, %s32
    %p132 = scmp.eq.s32.totalorder %s131, 0
    %s134 = sadd.s32 %s133, 1
    %s135 = scalar_select %p132, %s133, %s134
    %p138 = pneg %p132
    %p139 = scmp.eq.s32.totalorder %s13, 2
    %p140 = por %p138, %p139
    %p141 = scmp.ne.s32.totalorder %s133, %s136
    %p142 = scmp.eq.s32.totalorder %s13, 0
    %p143 = por %p141, %p142
    %p144 = scmp.ne.s32.totalorder %s133, %s136
    %p145 = scmp.eq.s32.totalorder %s18, 2
    %p146 = por %p144, %p145
    %p147 = scmp.ne.s32.totalorder %s136, %s137
    %p148 = scmp.eq.s32.totalorder %s18, 0
    %p149 = por %p147, %p148
    %p150 = scmp.ne.s32.totalorder %s136, %s137
    %p151 = scmp.eq.s32.totalorder %s19, 2
    %p152 = por %p150, %p151
    %p154 = scmp.ne.s32.totalorder %s137, %s153
    %p155 = scmp.eq.s32.totalorder %s19, 0
    %p156 = por %p154, %p155
    %s157 = ssub.s32 %s20, %s32
    %p158 = scmp.eq.s32.totalorder %s157, 0
    %s160 = sadd.s32 %s159, 1
    %s161 = scalar_select %p158, %s159, %s160
    %p164 = pneg %p158
    %p165 = scmp.eq.s32.totalorder %s13, 2
    %p166 = por %p164, %p165
    %p167 = scmp.ne.s32.totalorder %s159, %s162
    %p168 = scmp.eq.s32.totalorder %s13, 0
    %p169 = por %p167, %p168
    %p170 = scmp.ne.s32.totalorder %s159, %s162
    %p171 = scmp.eq.s32.totalorder %s18, 2
    %p172 = por %p170, %p171
    %p173 = scmp.ne.s32.totalorder %s162, %s163
    %p174 = scmp.eq.s32.totalorder %s18, 0
    %p175 = por %p173, %p174
    %p176 = scmp.ne.s32.totalorder %s162, %s163
    %p177 = scmp.eq.s32.totalorder %s19, 2
    %p178 = por %p176, %p177
    %p180 = scmp.ne.s32.totalorder %s163, %s179
    %p181 = scmp.eq.s32.totalorder %s19, 0
    %p182 = por %p180, %p181
    %p183 = scmp.le.s32.totalorder 1, %s13
    %p184 = scmp.lt.s32.totalorder %s13, 4
    %p185 = pnand %p183, %p184
    %p186 = pneg %p185
    // Predicated region
    $region9: #{snu_forward_seq.1} parent=5 // pred_check
      _
    $region10: #{snu_forward_seq.1} parent=5 // pred_check_branch
      %188 = sbr.rel (%p185) target = $region12
    $region11: #{snu_forward_seq.1} parent=5 // pred_region
      %s189 = ssub.s32 %s13, 1
      // Predicated region
      $region13: #{snu_forward_seq.1} parent=11 // pred_check
        %p190 = pneg %p46
      $region14: #{snu_forward_seq.1} parent=11 // pred_check_branch
        %192 = sbr.rel (%p190) target = $region16
      $region15: #{snu_forward_seq.1} parent=11 // pred_region
        _
      $region16: #{snu_forward_seq.1} parent=11 // pred_fallthru
        _
      // Predicated region
      $region17: #{snu_forward_seq.1} parent=11 // pred_check
        %p193 = pneg %p95
      $region18: #{snu_forward_seq.1} parent=11 // pred_check_branch
        %195 = sbr.rel (%p193) target = $region20
      $region19: #{snu_forward_seq.1} parent=11 // pred_region
        _
      $region20: #{snu_forward_seq.1} parent=11 // pred_fallthru
        _
    $region12: #{snu_forward_seq.1} parent=5 // pred_fallthru
      _
    %p196 = scmp.lt.s32.totalorder %s13, 3
    // Predicated region
    $region21: #{snu_forward_seq.1} parent=5 // pred_check
      %p197 = pneg %p196
    $region22: #{snu_forward_seq.1} parent=5 // pred_check_branch
      %199 = sbr.rel (%p197) target = $region24
    $region23: #{snu_forward_seq.1} parent=5 // pred_region
      // Predicated region
      $region25: #{snu_forward_seq.1} parent=23 // pred_check
        %p200 = pneg %p68
      $region26: #{snu_forward_seq.1} parent=23 // pred_check_branch
        %202 = sbr.rel (%p200) target = $region28
      $region27: #{snu_forward_seq.1} parent=23 // pred_region
        %s203 = smul.u32 3, %s21
        %s204 = smul.u32 2, %s20
        %p205 = scmp.lt.s32.totalorder %s203, 8
        %s206 = scalar_select %p205, %s203, 8
        %p207 = scmp.lt.s32.totalorder %s204, 1
        %s208 = scalar_select %p207, %s204, 1
        %s209 = smul.addr %s206, 2
        %s210 = sadd.s32 %s208, %s209
        %s211 = smul.addr %s210, 8
        %s212 = scalar_lea.vmem %s1, %s211
        %s213 = smul.u32 3, %s21
        %s214 = smul.u32 2, %s20
      $region28: #{snu_forward_seq.1} parent=23 // pred_fallthru
        _
    $region24: #{snu_forward_seq.1} parent=5 // pred_fallthru
      _
    %p215 = scmp.le.s32.totalorder 1, %s13
    %p216 = scmp.lt.s32.totalorder %s13, 4
    %p217 = pnand %p215, %p216
    %p218 = pneg %p217
    // Predicated region
    $region29: #{snu_forward_seq.1} parent=5 // pred_check
      _
    $region30: #{snu_forward_seq.1} parent=5 // pred_check_branch
      %220 = sbr.rel (%p217) target = $region32
    $region31: #{snu_forward_seq.1} parent=5 // pred_region
      %s221 = ssub.s32 %s13, 1
      %p222 = pneg %p46
      %p223 = pneg %p43
      %s224 = smul.u32 3, %s23
      %s225 = smul.u32 2, %s22
      %p226 = scmp.lt.s32.totalorder %s224, 8
      %s227 = scalar_select %p226, %s224, 8
      %p228 = scmp.lt.s32.totalorder %s225, 1
      %s229 = scalar_select %p228, %s225, 1
      %s230 = smul.addr %s227, 2
      %s231 = sadd.s32 %s229, %s230
      %s232 = smul.addr %s231, 8
      %s233 = scalar_lea.vmem %s1, %s232
      %p234 = pneg %p74
      %p235 = pneg %p71
      %p236 = pneg %p95
      %p237 = pneg %p92
      %p238 = pneg %p123
      %p239 = pneg %p120
      %s240 = smul.u32 3, %s23
      %s241 = smul.u32 2, %s22
      %p242 = scmp.lt.s32.totalorder %s240, 8
      %s243 = scalar_select %p242, %s240, 8
      %p244 = scmp.lt.s32.totalorder %s241, 1
      %s245 = scalar_select %p244, %s241, 1
      %s246 = smul.addr %s243, 2
      %s247 = sadd.s32 %s245, %s246
      %s248 = smul.addr %s247, 4
      %s249 = scalar_lea.vmem %s3, %s248
      %p250 = pneg %p149
      %p251 = pneg %p146
      %s252 = smul.u32 2, %s22
      %p253 = scmp.lt.s32.totalorder %s252, 1
      %s254 = scalar_select %p253, %s252, 1
      %s255 = smul.addr %s254, 8
      %s256 = scalar_lea.vmem %s4, %s255
      %p257 = pneg %p175
      %p258 = pneg %p172
      %s259 = smul.u32 2, %s22
      %p260 = scmp.lt.s32.totalorder %s259, 1
      %s261 = scalar_select %p260, %s259, 1
      %s262 = smul.addr %s261, 8
      %s263 = scalar_lea.vmem %s5, %s262
      %s264 = smul.u32 3, %s23
      %s265 = smul.u32 2, %s22
      %p266 = scmp.lt.s32.totalorder %s264, 8
      %s267 = scalar_select %p266, %s264, 8
      %p268 = scmp.lt.s32.totalorder %s265, 1
      %s269 = scalar_select %p268, %s265, 1
      %s270 = smul.addr %s267, 2
      %s271 = sadd.s32 %s269, %s270
      %s272 = smul.addr %s271, 8
      %s273 = scalar_lea.vmem %s1, %s272
      %s274 = smul.u32 3, %s23
      %s275 = smul.u32 2, %s22
      %s276 = smul.u32 3, %s23
      %s277 = smul.u32 2, %s22
      %p278 = scmp.lt.s32.totalorder %s276, 8
      %s279 = scalar_select %p278, %s276, 8
      %p280 = scmp.lt.s32.totalorder %s277, 1
      %s281 = scalar_select %p280, %s277, 1
      %s282 = smul.addr %s279, 2
      %s283 = sadd.s32 %s281, %s282
      %s284 = smul.addr %s283, 4
      %s285 = scalar_lea.vmem %s3, %s284
      %s286 = smul.u32 3, %s23
      %s287 = smul.u32 2, %s22
      %s288 = smul.u32 2, %s22
      %p289 = scmp.lt.s32.totalorder %s288, 1
      %s290 = scalar_select %p289, %s288, 1
      %s291 = smul.addr %s290, 8
      %s292 = scalar_lea.vmem %s4, %s291
      %s293 = smul.u32 2, %s22
      %s294 = smul.u32 2, %s22
      %p295 = scmp.lt.s32.totalorder %s294, 1
      %s296 = scalar_select %p295, %s294, 1
      %s297 = smul.addr %s296, 8
      %s298 = scalar_lea.vmem %s5, %s297
      %s299 = smul.u32 2, %s22
      %p300 = scmp.eq.s32.totalorder %s23, 0
      // Predicated region
      $region33: #{snu_forward_seq.1} parent=31 // pred_check
        %p301 = pneg %p300
      $region34: #{snu_forward_seq.1} parent=31 // pred_check_branch
        %303 = sbr.rel (%p301) target = $region36
      $region35: #{snu_forward_seq.1} parent=31 // pred_region
        %304 = vst [vmem:[%s292] sm:$0xff] 0.0
        %305 = vst [vmem:[%s292 + $0x8] sm:$0xff] 0.0
        %306 = vst [vmem:[%s298] sm:$0xff] 0.0
        %307 = vst [vmem:[%s298 + $0x8] sm:$0xff] 0.0
      $region36: #{snu_forward_seq.1} parent=31 // pred_fallthru
        _
      %v308 = vld [vmem:[%s273] sm:$0xff]
      %v309 = vld [vmem:[%s273 + $0x8] sm:$0xff]
      %v310 = vld [vmem:[%s273 + $0x10] sm:$0xff]
      %v311 = vld [vmem:[%s273 + $0x18] sm:$0xff]
      %v312 = vld [vmem:[%s273 + $0x20] sm:$0xff]
      %v313 = vld [vmem:[%s273 + $0x28] sm:$0xff]
      %v314 = vld [vmem:[%s2] sm:$0xff]
      %v315 = vld [vmem:[%s2 + $0x8] sm:$0xff]
      %v316 = vld [vmem:[%s2 + $0x10] sm:$0xff]
      %v317 = vld [vmem:[%s2 + $0x18] sm:$0xff]
      %v318 = vld [vmem:[%s2 + $0x20] sm:$0xff]
      %v319 = vld [vmem:[%s2 + $0x28] sm:$0xff]
      %v320 = vld [vmem:[%s2 + $0x30] sm:$0xff]
      %v321 = vld [vmem:[%s2 + $0x38] sm:$0xff]
      %v322 = vld [vmem:[%s2 + $0x40] sm:$0xff]
      %v323 = vld [vmem:[%s2 + $0x48] sm:$0xff]
      %v324 = vld [vmem:[%s2 + $0x50] sm:$0xff]
      %v325 = vld [vmem:[%s2 + $0x58] sm:$0xff]
      %v326 = vld [vmem:[%s2 + $0x60] sm:$0xff]
      %v327 = vld [vmem:[%s2 + $0x68] sm:$0xff]
      %v328 = vld [vmem:[%s2 + $0x70] sm:$0xff]
      %v329 = vld [vmem:[%s2 + $0x78] sm:$0xff]
      %330 = vmatprep.subr.mxu0 0.0
      %331 = vmatpush1.msra.mxu0 %v314
      %332 = vmatprep.subr.mxu0 0.0
      %333 = vmatpush1.msra.mxu0 %v315
      %334 = vmatprep.subr.mxu0 0.0
      %335 = vmatpush1.msra.mxu0 %v316
      %336 = vmatprep.subr.mxu0 0.0
      %337 = vmatpush1.msra.mxu0 %v317
      %338 = vmatprep.subr.mxu0 0.0
      %339 = vmatpush1.msra.mxu0 %v318
      %340 = vmatprep.subr.mxu0 0.0
      %341 = vmatpush1.msra.mxu0 %v319
      %342 = vmatprep.subr.mxu0 0.0
      %343 = vmatpush1.msra.mxu0 %v320
      %344 = vmatprep.subr.mxu0 0.0
      %345 = vmatpush1.msra.mxu0 %v321
      %346 = vmatprep.subr.mxu0 0.0
      %347 = vmatpush1.msra.mxu0 %v322
      %348 = vmatprep.subr.mxu0 0.0
      %349 = vmatpush1.msra.mxu0 %v323
      %350 = vmatprep.subr.mxu0 0.0
      %351 = vmatpush1.msra.mxu0 %v324
      %352 = vmatprep.subr.mxu0 0.0
      %353 = vmatpush1.msra.mxu0 %v325
      %354 = vmatprep.subr.mxu0 0.0
      %355 = vmatpush1.msra.mxu0 %v326
      %356 = vmatprep.subr.mxu0 0.0
      %357 = vmatpush1.msra.mxu0 %v327
      %358 = vmatprep.subr.mxu0 0.0
      %359 = vmatpush1.msra.mxu0 %v328
      %360 = vmatprep.subr.mxu0 0.0
      %361 = vmatpush1.msra.mxu0 %v329
      %362 = vmatprep.subr.mxu0 0.0
      %363 = vmatpush1.msra.mxu0 0.0
      %364 = vmatprep.subr.mxu0 0.0
      %365 = vmatpush1.msra.mxu0 0.0
      %366 = vmatprep.subr.mxu0 0.0
      %367 = vmatpush1.msra.mxu0 0.0
      %368 = vmatprep.subr.mxu0 0.0
      %369 = vmatpush1.msra.mxu0 0.0
      %370 = vmatprep.subr.mxu0 0.0
      %371 = vmatpush1.msra.mxu0 0.0
      %372 = vmatprep.subr.mxu0 0.0
      %373 = vmatpush1.msra.mxu0 0.0
      %374 = vmatprep.subr.mxu0 0.0
      %375 = vmatpush1.msra.mxu0 0.0
      %376 = vmatprep.subr.mxu0 0.0
      %377 = vmatpush1.msra.mxu0 0.0
      %378 = vmatprep.subr.mxu0 0.0
      %379 = vmatpush1.msra.mxu0 0.0
      %380 = vmatprep.subr.mxu0 0.0
      %381 = vmatpush1.msra.mxu0 0.0
      %382 = vmatprep.subr.mxu0 0.0
      %383 = vmatpush1.msra.mxu0 0.0
      %384 = vmatprep.subr.mxu0 0.0
      %385 = vmatpush1.msra.mxu0 0.0
      %386 = vmatprep.subr.mxu0 0.0
      %387 = vmatpush1.msra.mxu0 0.0
      %388 = vmatprep.subr.mxu0 0.0
      %389 = vmatpush1.msra.mxu0 0.0
      %390 = vmatprep.subr.mxu0 0.0
      %391 = vmatpush1.msra.mxu0 0.0
      %392 = vmatprep.subr.mxu0 0.0
      %393 = vmatpush1.msra.mxu0 0.0
      %394 = vmatprep.mubr.f32.mxu0 0.0
      %395 = vmatmul.mubr.f32.gmra.mrb[0].mxu0 %v308
      %v396 = vpop.f32.mrb[0].mxu0
      %v397 = vadd.f32 0.0, %v396
      %v398 = vpop.f32.mrb[0].mxu0
      %399 = vmatprep.mubr.f32.mxu0 0.0
      %400 = vmatmul.mubr.f32.gmra.mrb[0].mxu0 %v309
      %v401 = vpop.f32.mrb[0].mxu0
      %v402 = vadd.f32 0.0, %v401
      %v403 = vpop.f32.mrb[0].mxu0
      %404 = vmatprep.mubr.f32.mxu0 0.0
      %405 = vmatmul.mubr.f32.gmra.mrb[0].mxu0 %v310
      %v406 = vpop.f32.mrb[0].mxu0
      %v407 = vadd.f32 0.0, %v406
      %v408 = vpop.f32.mrb[0].mxu0
      %409 = vmatprep.mubr.f32.mxu0 0.0
      %410 = vmatmul.mubr.f32.gmra.mrb[0].mxu0 %v311
      %v411 = vpop.f32.mrb[0].mxu0
      %v412 = vadd.f32 0.0, %v411
      %v413 = vpop.f32.mrb[0].mxu0
      %414 = vmatprep.mubr.f32.mxu0 0.0
      %415 = vmatmul.mubr.f32.gmra.mrb[0].mxu0 %v312
      %v416 = vpop.f32.mrb[0].mxu0
      %v417 = vadd.f32 0.0, %v416
      %v418 = vpop.f32.mrb[0].mxu0
      %419 = vmatprep.mubr.f32.mxu0 0.0
      %420 = vmatmul.mubr.f32.gmra.mrb[0].mxu0 %v313
      %v421 = vpop.f32.mrb[0].mxu0
      %v422 = vadd.f32 0.0, %v421
      %v423 = vpop.f32.mrb[0].mxu0
      %424 = vdwg.mxu0
      %s425 = sld [smem:[#allocation2]]
      %s426 = ssub.f32 0.0, %s425
      %v427 = vld [vmem:[%s292] sm:$0xff]
      %v428 = vld [vmem:[%s292 + $0x8] sm:$0xff]
      %v429 = vld [vmem:[%s298] sm:$0xff]
      %v430 = vld [vmem:[%s298 + $0x8] sm:$0xff]
      %v431 = vmul.f32 %v427, 0.8
      %v432 = vmul.f32 %v428, 0.8
      %v433 = vsub.f32 1.0, %v429
      %v434 = vsub.f32 1.0, %v430
      %v435 = vmul.f32 %v431, %v433
      %v436 = vmul.f32 %v432, %v434
      %v437 = vadd.f32 %v397, %v435
      %v438 = vadd.f32 %v402, %v436
      %vm439 = vcmp.gt.f32.partialorder %v437, 0.0
      %vm440 = vcmp.gt.f32.partialorder %v438, 0.0
      %v441 = vmin.f32 %v437, 0.0
      %v442 = vmin.f32 %v438, 0.0
      %v443 = vmul.f32 %v441, 1.442695
      %v444 = vpow.pop %v443
      %v445 = vmul.f32 %v442, 1.442695
      %v446 = vpow.pop %v445
      %v447 = vsub.f32 %v444, 1.0
      %v448 = vsub.f32 %v446, 1.0
      %v449 = vsel %vm439, %v437, %v447
      %v450 = vsel %vm440, %v438, %v448
      %v451 = vstv %s426
      %vm452 = vcmp.gt.f32.partialorder %v449, %v451
      %vm453 = vcmp.gt.f32.partialorder %v450, %v451
      %v454 = vsel %vm452, 1, 0
      %v455 = vsel %vm453, 1, 0
      %v456 = vcvt.s32.f32 %v454
      %v457 = vcvt.s32.f32 %v455
      %v458 = vpack.c.bf16 %v457, %v456
      %v460 = vunpack.c.l.b16 %v458
      %v461 = vunpack.c.h.b16 %v458
      %v462 = vpack.c.b16 %v460, %v460
      %v463 = vpack.c.b16 %v461, %v461
      %466 = vst [vmem:[%s285] sm:$0xf] %v462
      %467 = vst [vmem:[%s285 + $0x4] sm:$0xf] %v463
      %s468 = smul.u32 %s23, 3
      %p469 = scmp.lt.s32.totalorder %s468, 8
      %s470 = scalar_select %p469, 1, 0
      %v471 = vstv %s470
      %vm472 = vcmp.eq.s32.totalorder %v471, 1
      %v473 = vsel %vm472, %v449, %v427
      %v474 = vsel %vm472, %v450, %v428
      %v475 = vsel %vm472, %v456, %v429
      %v476 = vsel %vm472, %v457, %v430
      %v477 = vmul.f32 %v473, 0.8
      %v478 = vmul.f32 %v474, 0.8
      %v479 = vsub.f32 1.0, %v475
      %v480 = vsub.f32 1.0, %v476
      %v481 = vmul.f32 %v477, %v479
      %v482 = vmul.f32 %v478, %v480
      %v483 = vadd.f32 %v407, %v481
      %v484 = vadd.f32 %v412, %v482
      %vm485 = vcmp.gt.f32.partialorder %v483, 0.0
      %vm486 = vcmp.gt.f32.partialorder %v484, 0.0
      %v487 = vmin.f32 %v483, 0.0
      %v488 = vmin.f32 %v484, 0.0
      %v489 = vmul.f32 %v487, 1.442695
      %v490 = vpow.pop %v489
      %v491 = vmul.f32 %v488, 1.442695
      %v492 = vpow.pop %v491
      %v493 = vsub.f32 %v490, 1.0
      %v494 = vsub.f32 %v492, 1.0
      %v495 = vsel %vm485, %v483, %v493
      %v496 = vsel %vm486, %v484, %v494
      %vm497 = vcmp.gt.f32.partialorder %v495, %v451
      %vm498 = vcmp.gt.f32.partialorder %v496, %v451
      %v499 = vsel %vm497, 1, 0
      %v500 = vsel %vm498, 1, 0
      %v501 = vcvt.s32.f32 %v499
      %v502 = vcvt.s32.f32 %v500
      %v503 = vpack.c.bf16 %v502, %v501
      %v505 = vunpack.c.l.b16 %v503
      %v506 = vunpack.c.h.b16 %v503
      %v507 = vpack.c.b16 %v505, %v505
      %v508 = vpack.c.b16 %v506, %v506
      %s511 = scalar_lea.vmem %s285, 8
      %512 = vst [vmem:[%s511] sm:$0xf] %v507
      %513 = vst [vmem:[%s511 + $0x4] sm:$0xf] %v508
      %s514 = sadd.s32 %s468, 1
      %p515 = scmp.lt.s32.totalorder %s514, 8
      %s516 = scalar_select %p515, 1, 0
      %v517 = vstv %s516
      %vm518 = vcmp.eq.s32.totalorder %v517, 1
      %v519 = vsel %vm518, %v495, %v473
      %v520 = vsel %vm518, %v496, %v474
      %v521 = vsel %vm518, %v501, %v475
      %v522 = vsel %vm518, %v502, %v476
      %v523 = vmul.f32 %v519, 0.8
      %v524 = vmul.f32 %v520, 0.8
      %v525 = vsub.f32 1.0, %v521
      %v526 = vsub.f32 1.0, %v522
      %v527 = vmul.f32 %v523, %v525
      %v528 = vmul.f32 %v524, %v526
      %v529 = vadd.f32 %v417, %v527
      %v530 = vadd.f32 %v422, %v528
      %vm531 = vcmp.gt.f32.partialorder %v529, 0.0
      %vm532 = vcmp.gt.f32.partialorder %v530, 0.0
      %v533 = vmin.f32 %v529, 0.0
      %v534 = vmin.f32 %v530, 0.0
      %v535 = vmul.f32 %v533, 1.442695
      %v536 = vpow.pop %v535
      %v537 = vmul.f32 %v534, 1.442695
      %v538 = vpow.pop %v537
      %v539 = vsub.f32 %v536, 1.0
      %v540 = vsub.f32 %v538, 1.0
      %v541 = vsel %vm531, %v529, %v539
      %v542 = vsel %vm532, %v530, %v540
      %vm543 = vcmp.gt.f32.partialorder %v541, %v451
      %vm544 = vcmp.gt.f32.partialorder %v542, %v451
      %v545 = vsel %vm543, 1, 0
      %v546 = vsel %vm544, 1, 0
      %v547 = vcvt.s32.f32 %v545
      %v548 = vcvt.s32.f32 %v546
      %v549 = vpack.c.bf16 %v548, %v547
      %v551 = vunpack.c.l.b16 %v549
      %v552 = vunpack.c.h.b16 %v549
      %v553 = vpack.c.b16 %v551, %v551
      %v554 = vpack.c.b16 %v552, %v552
      %s557 = scalar_lea.vmem %s285, 16
      %558 = vst [vmem:[%s557] sm:$0xf] %v553
      %559 = vst [vmem:[%s557 + $0x4] sm:$0xf] %v554
      %s560 = sadd.s32 %s468, 2
      %p561 = scmp.lt.s32.totalorder %s560, 8
      %s562 = scalar_select %p561, 1, 0
      %v563 = vstv %s562
      %vm564 = vcmp.eq.s32.totalorder %v563, 1
      %v565 = vsel %vm564, %v541, %v519
      %v566 = vsel %vm564, %v542, %v520
      %v567 = vsel %vm564, %v547, %v521
      %v568 = vsel %vm564, %v548, %v522
      %569 = vst [vmem:[%s292] sm:$0xff] %v565
      %570 = vst [vmem:[%s292 + $0x8] sm:$0xff] %v566
      %571 = vst [vmem:[%s298] sm:$0xff] %v567
      %572 = vst [vmem:[%s298 + $0x8] sm:$0xff] %v568
      %s573 = smul.u32 3, %s23
      %s574 = smul.u32 2, %s22
      %p575 = scmp.lt.s32.totalorder %s573, 8
      %s576 = scalar_select %p575, %s573, 8
      %p577 = scmp.lt.s32.totalorder %s574, 1
      %s578 = scalar_select %p577, %s574, 1
      %s579 = smul.addr %s576, 2
      %s580 = sadd.s32 %s578, %s579
      %s581 = smul.addr %s580, 4
      %s582 = scalar_lea.vmem %s3, %s581
      %s583 = smul.u32 2, %s22
      %p584 = scmp.lt.s32.totalorder %s583, 1
      %s585 = scalar_select %p584, %s583, 1
      %s586 = smul.addr %s585, 8
      %s587 = scalar_lea.vmem %s4, %s586
      %s588 = smul.u32 2, %s22
      %p589 = scmp.lt.s32.totalorder %s588, 1
      %s590 = scalar_select %p589, %s588, 1
      %s591 = smul.addr %s590, 8
      %s592 = scalar_lea.vmem %s5, %s591
      // Predicated region
      $region37: #{snu_forward_seq.1} parent=31 // pred_check
        %p593 = pneg %p120
      $region38: #{snu_forward_seq.1} parent=31 // pred_check_branch
        %595 = sbr.rel (%p593) target = $region40
      $region39: #{snu_forward_seq.1} parent=31 // pred_region
        %s596 = smul.u32 3, %s23
        %s597 = smul.u32 2, %s22
      $region40: #{snu_forward_seq.1} parent=31 // pred_fallthru
        _
      // Predicated region
      $region41: #{snu_forward_seq.1} parent=31 // pred_check
        %p598 = pneg %p146
      $region42: #{snu_forward_seq.1} parent=31 // pred_check_branch
        %600 = sbr.rel (%p598) target = $region44
      $region43: #{snu_forward_seq.1} parent=31 // pred_region
        %s601 = smul.u32 2, %s22
      $region44: #{snu_forward_seq.1} parent=31 // pred_fallthru
        _
      // Predicated region
      $region45: #{snu_forward_seq.1} parent=31 // pred_check
        %p602 = pneg %p172
      $region46: #{snu_forward_seq.1} parent=31 // pred_check_branch
        %604 = sbr.rel (%p602) target = $region48
      $region47: #{snu_forward_seq.1} parent=31 // pred_region
        %s605 = smul.u32 2, %s22
      $region48: #{snu_forward_seq.1} parent=31 // pred_fallthru
        _
      // Predicated region
      $region49: #{snu_forward_seq.1} parent=31 // pred_check
        %p606 = pneg %p146
      $region50: #{snu_forward_seq.1} parent=31 // pred_check_branch
        %608 = sbr.rel (%p606) target = $region52
      $region51: #{snu_forward_seq.1} parent=31 // pred_region
        %s609 = smul.u32 2, %s22
        %p610 = scmp.lt.s32.totalorder %s609, 1
        %s611 = scalar_select %p610, %s609, 1
        %s612 = smul.addr %s611, 8
        %s613 = scalar_lea.vmem %s4, %s612
      $region52: #{snu_forward_seq.1} parent=31 // pred_fallthru
        _
      // Predicated region
      $region53: #{snu_forward_seq.1} parent=31 // pred_check
        %p614 = pneg %p172
      $region54: #{snu_forward_seq.1} parent=31 // pred_check_branch
        %616 = sbr.rel (%p614) target = $region56
      $region55: #{snu_forward_seq.1} parent=31 // pred_region
        %s617 = smul.u32 2, %s22
        %p618 = scmp.lt.s32.totalorder %s617, 1
        %s619 = scalar_select %p618, %s617, 1
        %s620 = smul.addr %s619, 8
        %s621 = scalar_lea.vmem %s5, %s620
      $region56: #{snu_forward_seq.1} parent=31 // pred_fallthru
        _
    $region32: #{snu_forward_seq.1} parent=5 // pred_fallthru
      _
    %p622 = scmp.le.s32.totalorder 2, %s13
    // Predicated region
    $region57: #{snu_forward_seq.1} parent=5 // pred_check
      %p623 = pneg %p622
    $region58: #{snu_forward_seq.1} parent=5 // pred_check_branch
      %625 = sbr.rel (%p623) target = $region60
    $region59: #{snu_forward_seq.1} parent=5 // pred_region
      %s626 = ssub.s32 %s13, 2
      // Predicated region
      $region61: #{snu_forward_seq.1} parent=59 // pred_check
        %p627 = pneg %p126
      $region62: #{snu_forward_seq.1} parent=59 // pred_check_branch
        %629 = sbr.rel (%p627) target = $region64
      $region63: #{snu_forward_seq.1} parent=59 // pred_region
        %s630 = smul.u32 3, %s25
        %s631 = smul.u32 2, %s24
        %p632 = scmp.lt.s32.totalorder %s630, 8
        %s633 = scalar_select %p632, %s630, 8
        %p634 = scmp.lt.s32.totalorder %s631, 1
        %s635 = scalar_select %p634, %s631, 1
        %s636 = smul.addr %s633, 2
        %s637 = sadd.s32 %s635, %s636
        %s638 = smul.addr %s637, 4
        %s639 = scalar_lea.vmem %s3, %s638
      $region64: #{snu_forward_seq.1} parent=59 // pred_fallthru
        _
    $region60: #{snu_forward_seq.1} parent=5 // pred_fallthru
      _
  $region6: #{snu_forward_seq.1} parent=0 // loop_footer
    %s17 = sadd.s32 1, %s13
  $region7: #{snu_forward_seq.1} parent=0 // loop_footer_branch
    %12 = sbr.rel target = $region3
  $region8: #{snu_forward_seq.1} parent=0 // loop_exit
    _

</llo_original>
